<compile_context>
chip_gen: v5e
topology: v5e:2x2
jax: 0.10.0
libtpu: 0.0.40
codegen_flags: <defaults>
</compile_context>

<pallas_src>
import jax
import jax.numpy as jnp
from jax.experimental import pallas as pl
from jax.experimental.pallas import tpu as pltpu

_MiB = 1024 * 1024


def _distogram_kernel(z_ij_ref, z_ji_ref, w_ref, b2_ref, o_ref):
    # z_ij_ref: (1, TI, TJ, C)  tile of z at block (b, i, j)
    # z_ji_ref: (1, TJ, TI, C)  tile of z at block (b, j, i)
    # w_ref:    (C, NB)         linear weight (transposed vs. torch's (NB, C))
    # b2_ref:   (1, NB)         2 * linear bias (folded once)
    # o_ref:    (1, TI, TJ, NB) symmetrized logits tile
    zij = z_ij_ref[0]                       # (TI, TJ, C)
    zji = z_ji_ref[0]                       # (TJ, TI, C)
    w = w_ref[...]                          # (C, NB)
    b2 = b2_ref[...]                        # (1, NB) -> broadcasts over (TI, TJ, NB)

    ti, tj, c = zij.shape
    nb = w.shape[1]

    # Linear projection on the MXU; the (row, col) tile is flattened into the M dim.
    l_ij = jnp.dot(zij.reshape(ti * tj, c), w,
                   preferred_element_type=jnp.float32).reshape(ti, tj, nb)
    l_ji = jnp.dot(zji.reshape(tj * ti, c), w,
                   preferred_element_type=jnp.float32).reshape(tj, ti, nb)

    # out[p, q] = logits[i*TI+p, j*TJ+q] + logits[j*TJ+q, i*TI+p]   (bias -> 2*b)
    o_ref[0] = (l_ij + jnp.swapaxes(l_ji, 0, 1) + b2).astype(o_ref.dtype)


def _vmem_capacity_bytes():
    """Physical VMEM of the attached TPU; conservative fallback (v7x = 64 MiB)."""
    try:
        info = pltpu.get_tpu_info()
        cap = getattr(info, "vmem_capacity_bytes", None)
        if cap:
            return int(cap)
    except Exception:
        pass
    return 64 * _MiB


def _tile_footprint_bytes(t, c, nb):
    """Estimated VMEM footprint for one grid step at tile size t (f32)."""
    # Pipeline buffers, double-buffered: two z tiles + one output tile.
    bufs = 2 * (2 * t * t * c * 4 + t * t * nb * 4)
    # In-kernel temporaries (projections, transpose, reshape copies) -- conservative.
    temps = 4 * t * t * max(c, nb) * 4
    # Weight + bias (double-buffered).
    params = 2 * (c * nb * 4 + nb * 4)
    return bufs + temps + params


def _choose_tile(n, c, nb, budget_bytes):
    cands = [t for t in (256, 128, 64, 32, 16, 8) if t <= n]
    # Prefer tiles that divide n exactly (no padding).
    for t in cands:
        if n % t == 0 and _tile_footprint_bytes(t, c, nb) <= budget_bytes:
            return t
    for t in cands:
        if _tile_footprint_bytes(t, c, nb) <= budget_bytes:
            return t
    return min(n, 8)


def distogram_head(z, w, b, *, tile=None, vmem_limit_bytes=None):
    """z: [*, N, N, C_z]; w: [C_z, no_bins]; b: [no_bins] -> [*, N, N, no_bins] (f32)."""
    *batch, n1, n2, c = z.shape
    assert n1 == n2, "pair embedding must be square over the two N_res axes"
    n = n1
    nb = w.shape[1]

    zb = z.reshape((-1, n, n, c)).astype(jnp.float32)
    bsz = zb.shape[0]

    cap = _vmem_capacity_bytes()
    if vmem_limit_bytes is None:
        # Leave headroom for compiler-internal scratch; never request > physical VMEM.
        vmem_limit_bytes = min(int(cap * 0.75), 100 * _MiB)
    if tile is None:
        tile = _choose_tile(n, c, nb, int(vmem_limit_bytes * 0.85))

    # Pad N up to a multiple of the tile (padded region only produces garbage logits
    # that are sliced off; valid outputs read only valid z rows/cols).
    n_pad = ((n + tile - 1) // tile) * tile
    if n_pad != n:
        pad = n_pad - n
        zb = jnp.pad(zb, ((0, 0), (0, pad), (0, pad), (0, 0)))

    w32 = w.astype(jnp.float32)
    b2 = (2.0 * b).reshape(1, nb).astype(jnp.float32)   # folded bias (applied once)

    ti = tj = tile
    grid = (bsz, n_pad // ti, n_pad // tj)

    out = pl.pallas_call(
        _distogram_kernel,
        out_shape=jax.ShapeDtypeStruct((bsz, n_pad, n_pad, nb), jnp.float32),
        grid_spec=pltpu.PrefetchScalarGridSpec(
            num_scalar_prefetch=0,
            grid=grid,
            in_specs=[
                # tile (b, i, j) of z
                pl.BlockSpec((1, ti, tj, c), lambda bb, i, j: (bb, i, j, 0)),
                # tile (b, j, i) of the SAME z (for the transpose term)
                pl.BlockSpec((1, tj, ti, c), lambda bb, i, j: (bb, j, i, 0)),
                # weight / (2*bias) replicated across the grid
                pl.BlockSpec((c, nb), lambda bb, i, j: (0, 0)),
                pl.BlockSpec((1, nb), lambda bb, i, j: (0, 0)),
            ],
            out_specs=pl.BlockSpec((1, ti, tj, nb), lambda bb, i, j: (bb, i, j, 0)),
        ),
        compiler_params=pltpu.CompilerParams(
            dimension_semantics=("parallel", "parallel", "parallel"),
            vmem_limit_bytes=int(vmem_limit_bytes),
        ),
    )(zb, zb, w32, b2)

    if n_pad != n:
        out = out[:, :n, :n, :]
    return out.reshape(*batch, n, n, nb)


def _reference(z, w, b):
    logits = jnp.einsum("...ijc,cd->...ijd", z, w) + b
    return logits + jnp.swapaxes(logits, -2, -3)


if __name__ == "__main__":
    key = jax.random.PRNGKey(0)
    kz, kw, kb, kz2 = jax.random.split(key, 4)

    # Small shapes consistent with DistogramHead: pair embedding [B, N, N, C_z].
    B, N, C_Z, NO_BINS = 2, 16, 32, 64
    z = jax.random.normal(kz, (B, N, N, C_Z), dtype=jnp.float32)
    # NOTE: the module uses Linear(..., init='final') (zero weight/bias). We use a
    # small deterministic random init so the numeric check is non-trivial.
    w = 0.02 * jax.random.normal(kw, (C_Z, NO_BINS), dtype=jnp.float32)
    b = 0.01 * jax.random.normal(kb, (NO_BINS,), dtype=jnp.float32)

    out = jax.block_until_ready(distogram_head(z, w, b))
    ref = _reference(z, w, b)
    assert out.shape == (B, N, N, NO_BINS)
    assert jnp.allclose(out, ref, atol=1e-5, rtol=1e-5), float(jnp.max(jnp.abs(out - ref)))

    # Second case exercising the padding path (N not a multiple of the chosen tile).
    N2 = 20
    z2 = jax.random.normal(kz2, (1, N2, N2, C_Z), dtype=jnp.float32)
    out2 = jax.block_until_ready(distogram_head(z2, w, b, tile=16))
    ref2 = _reference(z2, w, b)
    assert out2.shape == (1, N2, N2, NO_BINS)
    assert jnp.allclose(out2, ref2, atol=1e-5, rtol=1e-5), float(jnp.max(jnp.abs(out2 - ref2)))

    print("KERNEL_OK")
</pallas_src>

<mosaic_0001>
module attributes {stable_mosaic.version = 11 : i64} {
  func.func @_distogram_kernel(%arg0: i32, %arg1: i32, %arg2: i32, %arg3: memref<1x16x16x32xf32, #tpu.memory_space<vmem>>, %arg4: memref<1x16x16x32xf32, #tpu.memory_space<vmem>>, %arg5: memref<32x64xf32, #tpu.memory_space<vmem>>, %arg6: memref<1x64xf32, #tpu.memory_space<vmem>>, %arg7: memref<1x16x16x64xf32, #tpu.memory_space<vmem>>) attributes {dimension_semantics = [#tpu.dimension_semantics<parallel>, #tpu.dimension_semantics<parallel>, #tpu.dimension_semantics<parallel>], iteration_bounds = array<i64: 2, 1, 1>, scalar_prefetch = 0 : i64, scratch_operands = 0 : i64, tpu.core_type = #tpu.core_type<tc>, window_params = [{transform_indices = @transform_0, window_bounds = array<i64: 1, 16, 16, 32>}, {transform_indices = @transform_1, window_bounds = array<i64: 1, 16, 16, 32>}, {pipeline_mode = #tpu.pipeline_mode<synchronous>, transform_indices = @transform_2, window_bounds = array<i64: 32, 64>}, {pipeline_mode = #tpu.pipeline_mode<synchronous>, transform_indices = @transform_3, window_bounds = array<i64: 1, 64>}, {transform_indices = @transform_4, window_bounds = array<i64: 1, 16, 16, 64>}]} {
    %c0 = arith.constant 0 : index
    %c0_0 = arith.constant 0 : index
    %c0_1 = arith.constant 0 : index
    %c0_2 = arith.constant 0 : index
    %0 = vector.load %arg3[%c0, %c0_0, %c0_1, %c0_2] : memref<1x16x16x32xf32, #tpu.memory_space<vmem>>, vector<1x16x16x32xf32>
    %1 = vector.shape_cast %0 : vector<1x16x16x32xf32> to vector<16x16x32xf32>
    %c0_3 = arith.constant 0 : index
    %c0_4 = arith.constant 0 : index
    %c0_5 = arith.constant 0 : index
    %c0_6 = arith.constant 0 : index
    %2 = vector.load %arg4[%c0_3, %c0_4, %c0_5, %c0_6] : memref<1x16x16x32xf32, #tpu.memory_space<vmem>>, vector<1x16x16x32xf32>
    %3 = vector.shape_cast %2 : vector<1x16x16x32xf32> to vector<16x16x32xf32>
    %c0_7 = arith.constant 0 : index
    %c0_8 = arith.constant 0 : index
    %4 = vector.load %arg5[%c0_7, %c0_8] : memref<32x64xf32, #tpu.memory_space<vmem>>, vector<32x64xf32>
    %c0_9 = arith.constant 0 : index
    %c0_10 = arith.constant 0 : index
    %5 = vector.load %arg6[%c0_9, %c0_10] : memref<1x64xf32, #tpu.memory_space<vmem>>, vector<1x64xf32>
    %6 = vector.shape_cast %1 : vector<16x16x32xf32> to vector<256x32xf32>
    %cst = arith.constant dense<0.000000e+00> : vector<256x64xf32>
    %7 = tpu.matmul %6, %4, %cst {dimension_numbers = #tpu.dot_dimension_numbers<[1], [0], [0], [1], [0, 0, 1, 1], [], []>} : vector<256x32xf32>, vector<32x64xf32>, vector<256x64xf32> -> vector<256x64xf32>
    %8 = vector.shape_cast %7 : vector<256x64xf32> to vector<16x16x64xf32>
    %9 = vector.shape_cast %3 : vector<16x16x32xf32> to vector<256x32xf32>
    %cst_11 = arith.constant dense<0.000000e+00> : vector<256x64xf32>
    %10 = tpu.matmul %9, %4, %cst_11 {dimension_numbers = #tpu.dot_dimension_numbers<[1], [0], [0], [1], [0, 0, 1, 1], [], []>} : vector<256x32xf32>, vector<32x64xf32>, vector<256x64xf32> -> vector<256x64xf32>
    %11 = vector.shape_cast %10 : vector<256x64xf32> to vector<16x16x64xf32>
    %12 = tpu.transpose %11, [1, 0, 2] : vector<16x16x64xf32> -> vector<16x16x64xf32>
    %13 = arith.addf %8, %12 : vector<16x16x64xf32>
    %14 = vector.shape_cast %5 : vector<1x64xf32> to vector<1x1x64xf32>
    %15 = vector.broadcast %14 : vector<1x1x64xf32> to vector<16x16x64xf32>
    %16 = arith.addf %13, %15 : vector<16x16x64xf32>
    %c0_12 = arith.constant 0 : index
    %c0_13 = arith.constant 0 : index
    %c0_14 = arith.constant 0 : index
    %c0_15 = arith.constant 0 : index
    %17 = vector.load %arg7[%c0_12, %c0_13, %c0_14, %c0_15] : memref<1x16x16x64xf32, #tpu.memory_space<vmem>>, vector<1x16x16x64xf32>
    %18 = vector.shape_cast %17 : vector<1x16x16x64xf32> to vector<16x16x64xf32>
    %19 = vector.shape_cast %16 : vector<16x16x64xf32> to vector<1x16x16x64xf32>
    tpu.vector_store %arg7[%c0_12, %c0_13, %c0_14, %c0_15], %19 {strides = array<i32>} : memref<1x16x16x64xf32, #tpu.memory_space<vmem>>, vector<1x16x16x64xf32>,
    return
  }
  func.func @transform_0(%arg0: i32, %arg1: i32, %arg2: i32) -> (i32, i32, i32, i32) {
    %c0_i32 = arith.constant 0 : i32
    %c0_i32_0 = arith.constant 0 : i32
    return %arg0, %arg1, %arg2, %c0_i32 : i32, i32, i32, i32
  }
  func.func @transform_1(%arg0: i32, %arg1: i32, %arg2: i32) -> (i32, i32, i32, i32) {
    %c0_i32 = arith.constant 0 : i32
    %c0_i32_0 = arith.constant 0 : i32
    return %arg0, %arg2, %arg1, %c0_i32 : i32, i32, i32, i32
  }
  func.func @transform_2(%arg0: i32, %arg1: i32, %arg2: i32) -> (i32, i32) {
    %c0_i32 = arith.constant 0 : i32
    %c0_i32_0 = arith.constant 0 : i32
    %c0_i32_1 = arith.constant 0 : i32
    return %c0_i32, %c0_i32_0 : i32, i32
  }
  func.func @transform_3(%arg0: i32, %arg1: i32, %arg2: i32) -> (i32, i32) {
    %c0_i32 = arith.constant 0 : i32
    %c0_i32_0 = arith.constant 0 : i32
    %c0_i32_1 = arith.constant 0 : i32
    return %c0_i32, %c0_i32_0 : i32, i32
  }
  func.func @transform_4(%arg0: i32, %arg1: i32, %arg2: i32) -> (i32, i32, i32, i32) {
    %c0_i32 = arith.constant 0 : i32
    %c0_i32_0 = arith.constant 0 : i32
    return %arg0, %arg1, %arg2, %c0_i32 : i32, i32, i32, i32
  }
}

</mosaic_0001>

<llo_original>
// kernel: tpu_custom_call.1
$region0: #{tpu_custom_call.1}
  #allocation0 [shape = 'u32[]', space=smem, size = 0x4, offset = 0x4, fixed_abs, tag = 'smem constant byte address 0x4 - core index']
  #allocation1 [shape = 'u32[72,128]{1,0:T(1,128)}', space=vmem, size = 0x9000, scoped, tag = 'internal scratch']
  %s0 = inlined_call_operand.hbm [shape: f32[2,16,16,32], index: 0, kind: input, shape index: {}]
  %s1 = inlined_call_operand.hbm [shape: f32[2,16,16,32], index: 1, kind: input, shape index: {}]
  %s2 = inlined_call_operand.hbm [shape: f32[32,64], index: 2, kind: input, shape index: {}]
  %s3 = inlined_call_operand.vmem [shape: f32[1,64], index: 3, kind: input, shape index: {}]
  %s4 = inlined_call_operand.hbm [shape: f32[2,16,16,64], index: 4, kind: output, shape index: {}]
  %s5 = sld [smem:[#allocation0]]
  $region61: #{tpu_custom_call.1} parent=0
    _
  %s7 = ssub.s32 1, %s5
  %s8 = scalar_select 0, %s7, %s5
  $region1: #{tpu_custom_call.1} parent=0
    #allocation2 [shape = 'u8[262144]{0}', space=vmem, size = 0x40000, scoped, tag = 'input window, operand 0']
    #allocation3 [shape = 's32[2]{0}', space=sflag, size = 0x8, scoped, tag = 'scoped memory for tpu_custom_call.1']
    #allocation4 [shape = 's32[2]{0}', space=sflag, size = 0x8, scoped, tag = 'scoped memory for tpu_custom_call.1']
    #allocation5 [shape = 'u8[262144]{0}', space=vmem, size = 0x40000, scoped, tag = 'input window, operand 1']
    #allocation6 [shape = 's32[2]{0}', space=sflag, size = 0x8, scoped, tag = 'scoped memory for tpu_custom_call.1']
    #allocation7 [shape = 'u8[16384]{0}', space=vmem, size = 0x4000, scoped, tag = 'input window, operand 2, single buffered']
    #allocation8 [shape = 'u8[262144]{0}', space=vmem, size = 0x40000, scoped, tag = 'output window, operand 0']
    %9 = vsyncpa [#allocation3], 0
    %s10 = scalar_lea.sflag [#allocation3], 1
    %11 = vsyncpa %s10, 0
    %12 = vsyncpa [#allocation6], 0
    %s13 = scalar_lea.sflag [#allocation6], 1
    %14 = vsyncpa %s13, 0
    %15 = vsyncpa [#allocation4], 0
    %s16 = scalar_lea.sflag [#allocation4], 1
    %17 = vsyncpa %s16, 0
    loop: start=0, step=1, limit=4
    $region2: #{tpu_custom_call.1} parent=1 // loop_pre_header
      _
    $region3: #{tpu_custom_call.1} parent=1 // loop_header
      %s19 = sphi 0, %s23
      %p20 = scmp.ge.s32.totalorder %s19, 4
      %s26 = sphi 0, %s45
      %s27 = sphi 0, %s41
      %s28 = sphi 0, %s37
      %s29 = sphi 0, %s26
      %s30 = sphi 0, %s27
      %s31 = sphi 0, %s28
      %s32 = sphi 0, %s29
      %s33 = sphi 0, %s30
      %s34 = sphi 0, %s31
      %s52 = sphi 0, %s54
      %s55 = sphi 0, %s52
      %s56 = sphi 0, %s55
      %s72 = sphi 0, %s56
      %s82 = sphi 0, %s84
      %s85 = sphi 0, %s82
      %s86 = sphi 0, %s85
      %s102 = sphi 0, %s86
      %s106 = sphi 0, %s106
      %s108 = sphi 0, %s106
      %s109 = sphi 0, %s108
      %s123 = sphi 0, %s109
      %s127 = sphi 0, %s127
      %s129 = sphi 0, %s127
      %s130 = sphi 0, %s129
      %s144 = sphi 0, %s130
      %s154 = sphi 0, %s156
      %s157 = sphi 0, %s154
      %s158 = sphi 0, %s157
      %s174 = sphi 0, %s158
    $region4: #{tpu_custom_call.1} parent=1 // loop_header_branch
      %22 = sbr.rel (%p20) target = $region8
    $region5: #{tpu_custom_call.1} parent=1 // loop_body
      %s24 = ssub.s32 %s19, 1
      %s25 = ssub.s32 %s19, 2
      %s35 = sadd.s32 1, %s28
      %p36 = scmp.ge.s32.totalorder %s35, 1
      %s37 = scalar_select %p36, 0, %s35
      %s38 = sadd.s32 1, %s27
      %s39 = scalar_select %p36, %s38, %s27
      %p40 = scmp.ge.s32.totalorder %s39, 1
      %s41 = scalar_select %p40, 0, %s39
      %s42 = sadd.s32 1, %s26
      %s43 = scalar_select %p40, %s42, %s26
      %p44 = scmp.ge.s32.totalorder %s43, 2
      %s45 = scalar_select %p44, 0, %s43
      %s46 = ssub.s32 %s26, %s45
      %s47 = ssub.s32 %s27, %s41
      %s48 = sor.u32 %s46, %s47
      %s49 = ssub.s32 %s28, %s37
      %s50 = sor.u32 %s48, %s49
      %p51 = scmp.eq.s32.totalorder %s50, 0
      %s53 = sadd.s32 %s52, 1
      %s54 = scalar_select %p51, %s52, %s53
      %p57 = pneg %p51
      %p58 = scmp.eq.s32.totalorder %s19, 1
      %p59 = por %p57, %p58
      %p60 = scmp.ne.s32.totalorder %s52, %s55
      %p61 = scmp.eq.s32.totalorder %s19, 0
      %p62 = por %p60, %p61
      %p63 = scmp.ne.s32.totalorder %s52, %s55
      %p64 = scmp.eq.s32.totalorder %s24, 1
      %p65 = por %p63, %p64
      %p66 = scmp.ne.s32.totalorder %s55, %s56
      %p67 = scmp.eq.s32.totalorder %s24, 0
      %p68 = por %p66, %p67
      %p69 = scmp.ne.s32.totalorder %s55, %s56
      %p70 = scmp.eq.s32.totalorder %s25, 1
      %p71 = por %p69, %p70
      %p73 = scmp.ne.s32.totalorder %s56, %s72
      %p74 = scmp.eq.s32.totalorder %s25, 0
      %p75 = por %p73, %p74
      %s76 = ssub.s32 %s26, %s45
      %s77 = ssub.s32 %s28, %s37
      %s78 = sor.u32 %s76, %s77
      %s79 = ssub.s32 %s27, %s41
      %s80 = sor.u32 %s78, %s79
      %p81 = scmp.eq.s32.totalorder %s80, 0
      %s83 = sadd.s32 %s82, 1
      %s84 = scalar_select %p81, %s82, %s83
      %p87 = pneg %p81
      %p88 = scmp.eq.s32.totalorder %s19, 1
      %p89 = por %p87, %p88
      %p90 = scmp.ne.s32.totalorder %s82, %s85
      %p91 = scmp.eq.s32.totalorder %s19, 0
      %p92 = por %p90, %p91
      %p93 = scmp.ne.s32.totalorder %s82, %s85
      %p94 = scmp.eq.s32.totalorder %s24, 1
      %p95 = por %p93, %p94
      %p96 = scmp.ne.s32.totalorder %s85, %s86
      %p97 = scmp.eq.s32.totalorder %s24, 0
      %p98 = por %p96, %p97
      %p99 = scmp.ne.s32.totalorder %s85, %s86
      %p100 = scmp.eq.s32.totalorder %s25, 1
      %p101 = por %p99, %p100
      %p103 = scmp.ne.s32.totalorder %s86, %s102
      %p104 = scmp.eq.s32.totalorder %s25, 0
      %p105 = por %p103, %p104
      %s107 = sadd.s32 %s106, 1
      %p110 = scmp.eq.s32.totalorder %s19, 1
      %p111 = scmp.ne.s32.totalorder %s106, %s108
      %p112 = scmp.eq.s32.totalorder %s19, 0
      %p113 = por %p111, %p112
      %p114 = scmp.ne.s32.totalorder %s106, %s108
      %p115 = scmp.eq.s32.totalorder %s24, 1
      %p116 = por %p114, %p115
      %p117 = scmp.ne.s32.totalorder %s108, %s109
      %p118 = scmp.eq.s32.totalorder %s24, 0
      %p119 = por %p117, %p118
      %p120 = scmp.ne.s32.totalorder %s108, %s109
      %p121 = scmp.eq.s32.totalorder %s25, 1
      %p122 = por %p120, %p121
      %p124 = scmp.ne.s32.totalorder %s109, %s123
      %p125 = scmp.eq.s32.totalorder %s25, 0
      %p126 = por %p124, %p125
      %s128 = sadd.s32 %s127, 1
      %p131 = scmp.eq.s32.totalorder %s19, 1
      %p132 = scmp.ne.s32.totalorder %s127, %s129
      %p133 = scmp.eq.s32.totalorder %s19, 0
      %p134 = por %p132, %p133
      %p135 = scmp.ne.s32.totalorder %s127, %s129
      %p136 = scmp.eq.s32.totalorder %s24, 1
      %p137 = por %p135, %p136
      %p138 = scmp.ne.s32.totalorder %s129, %s130
      %p139 = scmp.eq.s32.totalorder %s24, 0
      %p140 = por %p138, %p139
      %p141 = scmp.ne.s32.totalorder %s129, %s130
      %p142 = scmp.eq.s32.totalorder %s25, 1
      %p143 = por %p141, %p142
      %p145 = scmp.ne.s32.totalorder %s130, %s144
      %p146 = scmp.eq.s32.totalorder %s25, 0
      %p147 = por %p145, %p146
      %s148 = ssub.s32 %s26, %s45
      %s149 = ssub.s32 %s27, %s41
      %s150 = sor.u32 %s148, %s149
      %s151 = ssub.s32 %s28, %s37
      %s152 = sor.u32 %s150, %s151
      %p153 = scmp.eq.s32.totalorder %s152, 0
      %s155 = sadd.s32 %s154, 1
      %s156 = scalar_select %p153, %s154, %s155
      %p159 = pneg %p153
      %p160 = scmp.eq.s32.totalorder %s19, 1
      %p161 = por %p159, %p160
      %p162 = scmp.ne.s32.totalorder %s154, %s157
      %p163 = scmp.eq.s32.totalorder %s19, 0
      %p164 = por %p162, %p163
      %p165 = scmp.ne.s32.totalorder %s154, %s157
      %p166 = scmp.eq.s32.totalorder %s24, 1
      %p167 = por %p165, %p166
      %p168 = scmp.ne.s32.totalorder %s157, %s158
      %p169 = scmp.eq.s32.totalorder %s24, 0
      %p170 = por %p168, %p169
      %p171 = scmp.ne.s32.totalorder %s157, %s158
      %p172 = scmp.eq.s32.totalorder %s25, 1
      %p173 = por %p171, %p172
      %p175 = scmp.ne.s32.totalorder %s158, %s174
      %p176 = scmp.eq.s32.totalorder %s25, 0
      %p177 = por %p175, %p176
      %p178 = scmp.le.s32.totalorder 1, %s19
      %p179 = scmp.lt.s32.totalorder %s19, 3
      %p180 = pnand %p178, %p179
      %p181 = pneg %p180
      // Predicated region
      $region9: #{tpu_custom_call.1} parent=5 // pred_check
        _
      $region10: #{tpu_custom_call.1} parent=5 // pred_check_branch
        %183 = sbr.rel (%p180) target = $region12
      $region11: #{tpu_custom_call.1} parent=5 // pred_region
        %s184 = ssub.s32 %s19, 1
        // Predicated region
        $region13: #{tpu_custom_call.1} parent=11 // pred_check
          %p185 = pneg %p119
        $region14: #{tpu_custom_call.1} parent=11 // pred_check_branch
          %187 = sbr.rel (%p185) target = $region16
        $region15: #{tpu_custom_call.1} parent=11 // pred_region
          %189 = vsyncadd [#allocation6], 0
          %s190 = sshll.u32 %s2, 4
          %s191 = int_to_ptr.hbm [resolvable:$true] %s190
          %s192 = sshll.u32 [#allocation7], 4
          %s193 = int_to_ptr.vmem [resolvable:$true] %s192
          %198 = dma.hbm_to_vmem [thread:$0]  %s191, 512, %s193, [#allocation6], 128, 128, 8
        $region16: #{tpu_custom_call.1} parent=11 // pred_fallthru
          _
        // Predicated region
        $region17: #{tpu_custom_call.1} parent=11 // pred_check
          %p199 = pneg %p140
        $region18: #{tpu_custom_call.1} parent=11 // pred_check_branch
          %201 = sbr.rel (%p199) target = $region20
        $region19: #{tpu_custom_call.1} parent=11 // pred_region
          _
        $region20: #{tpu_custom_call.1} parent=11 // pred_fallthru
          _
      $region12: #{tpu_custom_call.1} parent=5 // pred_fallthru
        _
      %p202 = scmp.lt.s32.totalorder %s19, 2
      // Predicated region
      $region21: #{tpu_custom_call.1} parent=5 // pred_check
        %p203 = pneg %p202
      $region22: #{tpu_custom_call.1} parent=5 // pred_check_branch
        %205 = sbr.rel (%p203) target = $region24
      $region23: #{tpu_custom_call.1} parent=5 // pred_region
        // Predicated region
        $region25: #{tpu_custom_call.1} parent=23 // pred_check
          %p206 = pneg %p62
        $region26: #{tpu_custom_call.1} parent=23 // pred_check_branch
          %208 = sbr.rel (%p206) target = $region28
        $region27: #{tpu_custom_call.1} parent=23 // pred_region
          %s209 = sand.u32 %s52, 1
          %s210 = scalar_lea.sflag [#allocation3], %s209
          %s211 = sand.u32 %s52, 1
          %s212 = smul.addr %s211, 256
          %s213 = scalar_lea.vmem [#allocation2], %s212
          %s214 = smul.u32 16, %s27
          %s215 = smul.u32 2, %s28
          %217 = vsyncadd %s210, 0
          %s218 = smul.addr %s214, 2
          %s219 = sadd.s32 %s215, %s218
          %s220 = smul.addr %s26, 32
          %s221 = sadd.s32 %s219, %s220
          %s222 = smul.addr %s221, 8
          %s223 = scalar_lea.hbm %s0, %s222
          %s224 = sshll.u32 %s223, 4
          %s225 = int_to_ptr.hbm [resolvable:$true] %s224
          %s226 = sshll.u32 %s213, 4
          %s227 = int_to_ptr.vmem [resolvable:$true] %s226
          %232 = dma.hbm_to_vmem [thread:$0]  %s225, 4096, %s227, %s210, 128, 128, 8
        $region28: #{tpu_custom_call.1} parent=23 // pred_fallthru
          _
        // Predicated region
        $region29: #{tpu_custom_call.1} parent=23 // pred_check
          %p233 = pneg %p92
        $region30: #{tpu_custom_call.1} parent=23 // pred_check_branch
          %235 = sbr.rel (%p233) target = $region32
        $region31: #{tpu_custom_call.1} parent=23 // pred_region
          %s236 = sand.u32 %s19, 1
          %s237 = scalar_lea.sflag [#allocation6], %s236
          %s238 = sand.u32 %s82, 1
          %s239 = smul.addr %s238, 256
          %s240 = scalar_lea.vmem [#allocation5], %s239
          %s241 = smul.u32 16, %s28
          %s242 = smul.u32 2, %s27
          %244 = vsyncadd %s237, 0
          %s245 = smul.addr %s241, 2
          %s246 = sadd.s32 %s242, %s245
          %s247 = smul.addr %s26, 32
          %s248 = sadd.s32 %s246, %s247
          %s249 = smul.addr %s248, 8
          %s250 = scalar_lea.hbm %s1, %s249
          %s251 = sshll.u32 %s250, 4
          %s252 = int_to_ptr.hbm [resolvable:$true] %s251
          %s253 = sshll.u32 %s240, 4
          %s254 = int_to_ptr.vmem [resolvable:$true] %s253
          %259 = dma.hbm_to_vmem [thread:$0]  %s252, 4096, %s254, %s237, 128, 128, 8
        $region32: #{tpu_custom_call.1} parent=23 // pred_fallthru
          _
      $region24: #{tpu_custom_call.1} parent=5 // pred_fallthru
        _
      %p260 = scmp.le.s32.totalorder 1, %s19
      %p261 = scmp.lt.s32.totalorder %s19, 3
      %p262 = pnand %p260, %p261
      %p263 = pneg %p262
      // Predicated region
      $region33: #{tpu_custom_call.1} parent=5 // pred_check
        _
      $region34: #{tpu_custom_call.1} parent=5 // pred_check_branch
        %265 = sbr.rel (%p262) target = $region36
      $region35: #{tpu_custom_call.1} parent=5 // pred_region
        %s266 = ssub.s32 %s19, 1
        %s267 = sand.u32 %s55, 1
        %s268 = scalar_lea.sflag [#allocation3], %s267
        %s269 = sand.u32 %s55, 1
        %s270 = smul.addr %s269, 256
        %s271 = scalar_lea.vmem [#allocation2], %s270
        // Predicated region
        $region37: #{tpu_custom_call.1} parent=35 // pred_check
          %p272 = pneg %p68
        $region38: #{tpu_custom_call.1} parent=35 // pred_check_branch
          %274 = sbr.rel (%p272) target = $region40
        $region39: #{tpu_custom_call.1} parent=35 // pred_region
          %276 = dma.done %s268, 4096
        $region40: #{tpu_custom_call.1} parent=35 // pred_fallthru
          _
        %s277 = sand.u32 %s24, 1
        %s278 = scalar_lea.sflag [#allocation6], %s277
        %s279 = sand.u32 %s85, 1
        %s280 = smul.addr %s279, 256
        %s281 = scalar_lea.vmem [#allocation5], %s280
        // Predicated region
        $region41: #{tpu_custom_call.1} parent=35 // pred_check
          %p282 = pneg %p98
        $region42: #{tpu_custom_call.1} parent=35 // pred_check_branch
          %284 = sbr.rel (%p282) target = $region44
        $region43: #{tpu_custom_call.1} parent=35 // pred_region
          %286 = dma.done %s278, 4096
        $region44: #{tpu_custom_call.1} parent=35 // pred_fallthru
          _
        // Predicated region
        $region45: #{tpu_custom_call.1} parent=35 // pred_check
          %p287 = pneg %p119
        $region46: #{tpu_custom_call.1} parent=35 // pred_check_branch
          %289 = sbr.rel (%p287) target = $region48
        $region47: #{tpu_custom_call.1} parent=35 // pred_region
          %291 = dma.done [#allocation6], 512
        $region48: #{tpu_custom_call.1} parent=35 // pred_fallthru
          _
        %s292 = sand.u32 %s55, 1
        %s293 = scalar_lea.sflag [#allocation3], %s292
        %s294 = sand.u32 %s55, 1
        %s295 = smul.addr %s294, 256
        %s296 = scalar_lea.vmem [#allocation2], %s295
        %p297 = pneg %p68
        %p298 = pneg %p65
        %s299 = sand.u32 %s24, 1
        %s300 = scalar_lea.sflag [#allocation6], %s299
        %s301 = sand.u32 %s85, 1
        %s302 = smul.addr %s301, 256
        %s303 = scalar_lea.vmem [#allocation5], %s302
        %p304 = pneg %p98
        %p305 = pneg %p95
        %p306 = pneg %p119
        %p307 = pneg %p116
        %p308 = pneg %p140
        %p309 = pneg %p137
        %p310 = pneg %p170
        %p311 = pneg %p167
        %s312 = sand.u32 %s157, 1
        %s313 = scalar_lea.sflag [#allocation4], %s312
        %s314 = sand.u32 %s157, 1
        %s315 = smul.addr %s314, 256
        %s316 = scalar_lea.vmem [#allocation8], %s315
        %s317 = smul.u32 16, %s30
        %s318 = smul.u32 2, %s31
        %s319 = smul.u32 16, %s31
        %s320 = smul.u32 2, %s30
        %s321 = smul.u32 16, %s30
        %s322 = smul.u32 2, %s31
        %v323 = vld [vmem:[%s271] sm:$0xff]
        %v324 = vld [vmem:[%s271 + $0x8] sm:$0xff]
        %v325 = vld [vmem:[%s271 + $0x10] sm:$0xff]
        %v326 = vld [vmem:[%s271 + $0x18] sm:$0xff]
        %v327 = vld [vmem:[%s271 + $0x20] sm:$0xff]
        %v328 = vld [vmem:[%s271 + $0x28] sm:$0xff]
        %v329 = vld [vmem:[%s271 + $0x30] sm:$0xff]
        %v330 = vld [vmem:[%s271 + $0x38] sm:$0xff]
        %v331 = vld [vmem:[%s271 + $0x40] sm:$0xff]
        %v332 = vld [vmem:[%s271 + $0x48] sm:$0xff]
        %v333 = vld [vmem:[%s271 + $0x50] sm:$0xff]
        %v334 = vld [vmem:[%s271 + $0x58] sm:$0xff]
        %v335 = vld [vmem:[%s271 + $0x60] sm:$0xff]
        %v336 = vld [vmem:[%s271 + $0x68] sm:$0xff]
        %v337 = vld [vmem:[%s271 + $0x70] sm:$0xff]
        %v338 = vld [vmem:[%s271 + $0x78] sm:$0xff]
        %v339 = vld [vmem:[%s271 + $0x80] sm:$0xff]
        %v340 = vld [vmem:[%s271 + $0x88] sm:$0xff]
        %v341 = vld [vmem:[%s271 + $0x90] sm:$0xff]
        %v342 = vld [vmem:[%s271 + $0x98] sm:$0xff]
        %v343 = vld [vmem:[%s271 + $0xa0] sm:$0xff]
        %v344 = vld [vmem:[%s271 + $0xa8] sm:$0xff]
        %v345 = vld [vmem:[%s271 + $0xb0] sm:$0xff]
        %v346 = vld [vmem:[%s271 + $0xb8] sm:$0xff]
        %v347 = vld [vmem:[%s271 + $0xc0] sm:$0xff]
        %v348 = vld [vmem:[%s271 + $0xc8] sm:$0xff]
        %v349 = vld [vmem:[%s271 + $0xd0] sm:$0xff]
        %v350 = vld [vmem:[%s271 + $0xd8] sm:$0xff]
        %v351 = vld [vmem:[%s271 + $0xe0] sm:$0xff]
        %v352 = vld [vmem:[%s271 + $0xe8] sm:$0xff]
        %v353 = vld [vmem:[%s271 + $0xf0] sm:$0xff]
        %v354 = vld [vmem:[%s271 + $0xf8] sm:$0xff]
        %v355 = vld [vmem:[%s281] sm:$0xff]
        %v356 = vld [vmem:[%s281 + $0x8] sm:$0xff]
        %v357 = vld [vmem:[%s281 + $0x10] sm:$0xff]
        %v358 = vld [vmem:[%s281 + $0x18] sm:$0xff]
        %v359 = vld [vmem:[%s281 + $0x20] sm:$0xff]
        %v360 = vld [vmem:[%s281 + $0x28] sm:$0xff]
        %v361 = vld [vmem:[%s281 + $0x30] sm:$0xff]
        %v362 = vld [vmem:[%s281 + $0x38] sm:$0xff]
        %v363 = vld [vmem:[%s281 + $0x40] sm:$0xff]
        %v364 = vld [vmem:[%s281 + $0x48] sm:$0xff]
        %v365 = vld [vmem:[%s281 + $0x50] sm:$0xff]
        %v366 = vld [vmem:[%s281 + $0x58] sm:$0xff]
        %v367 = vld [vmem:[%s281 + $0x60] sm:$0xff]
        %v368 = vld [vmem:[%s281 + $0x68] sm:$0xff]
        %v369 = vld [vmem:[%s281 + $0x70] sm:$0xff]
        %v370 = vld [vmem:[%s281 + $0x78] sm:$0xff]
        %v371 = vld [vmem:[%s281 + $0x80] sm:$0xff]
        %v372 = vld [vmem:[%s281 + $0x88] sm:$0xff]
        %v373 = vld [vmem:[%s281 + $0x90] sm:$0xff]
        %v374 = vld [vmem:[%s281 + $0x98] sm:$0xff]
        %v375 = vld [vmem:[%s281 + $0xa0] sm:$0xff]
        %v376 = vld [vmem:[%s281 + $0xa8] sm:$0xff]
        %v377 = vld [vmem:[%s281 + $0xb0] sm:$0xff]
        %v378 = vld [vmem:[%s281 + $0xb8] sm:$0xff]
        %v379 = vld [vmem:[%s281 + $0xc0] sm:$0xff]
        %v380 = vld [vmem:[%s281 + $0xc8] sm:$0xff]
        %v381 = vld [vmem:[%s281 + $0xd0] sm:$0xff]
        %v382 = vld [vmem:[%s281 + $0xd8] sm:$0xff]
        %v383 = vld [vmem:[%s281 + $0xe0] sm:$0xff]
        %v384 = vld [vmem:[%s281 + $0xe8] sm:$0xff]
        %v385 = vld [vmem:[%s281 + $0xf0] sm:$0xff]
        %v386 = vld [vmem:[%s281 + $0xf8] sm:$0xff]
        %v387 = vld [vmem:[#allocation7] sm:$0xff]
        %v388 = vld [vmem:[#allocation7 + $0x8] sm:$0xff]
        %v389 = vld [vmem:[#allocation7 + $0x10] sm:$0xff]
        %v390 = vld [vmem:[#allocation7 + $0x18] sm:$0xff]
        %v391 = vld [vmem:[%s3] sm:$0x1]
        %vm392 = vcmask 261120
        %v394 = vsel %vm392, %v323, 0
        %v397 = vsel %vm392, %v324, 0
        %v400 = vsel %vm392, %v325, 0
        %v403 = vsel %vm392, %v326, 0
        %v406 = vsel %vm392, %v327, 0
        %v409 = vsel %vm392, %v328, 0
        %v412 = vsel %vm392, %v329, 0
        %v415 = vsel %vm392, %v330, 0
        %v418 = vsel %vm392, %v331, 0
        %v421 = vsel %vm392, %v332, 0
        %v424 = vsel %vm392, %v333, 0
        %v427 = vsel %vm392, %v334, 0
        %v430 = vsel %vm392, %v335, 0
        %v433 = vsel %vm392, %v336, 0
        %v436 = vsel %vm392, %v337, 0
        %v439 = vsel %vm392, %v338, 0
        %v442 = vsel %vm392, %v339, 0
        %v445 = vsel %vm392, %v340, 0
        %v448 = vsel %vm392, %v341, 0
        %v451 = vsel %vm392, %v342, 0
        %v454 = vsel %vm392, %v343, 0
        %v457 = vsel %vm392, %v344, 0
        %v460 = vsel %vm392, %v345, 0
        %v463 = vsel %vm392, %v346, 0
        %v466 = vsel %vm392, %v347, 0
        %v469 = vsel %vm392, %v348, 0
        %v472 = vsel %vm392, %v349, 0
        %v475 = vsel %vm392, %v350, 0
        %v478 = vsel %vm392, %v351, 0
        %v481 = vsel %vm392, %v352, 0
        %v484 = vsel %vm392, %v353, 0
        %v487 = vsel %vm392, %v354, 0
        %489 = vmatpush.msra.mxu0 0.0
        %490 = vmatpush.msra.mxu0 0.0
        %491 = vmatpush.msra.mxu0 0.0
        %492 = vmatpush.msra.mxu0 0.0
        %493 = vmatpush.msra.mxu0 0.0
        %494 = vmatpush.msra.mxu0 0.0
        %495 = vmatpush.msra.mxu0 0.0
        %496 = vmatpush.msra.mxu0 0.0
        %497 = vmatpush.msra.mxu0 0.0
        %498 = vmatpush.msra.mxu0 0.0
        %499 = vmatpush.msra.mxu0 0.0
        %500 = vmatpush.msra.mxu0 0.0
        %501 = vmatpush.msra.mxu0 %v390
        %502 = vmatpush.msra.mxu0 %v389
        %503 = vmatpush.msra.mxu0 %v388
        %504 = vmatpush.msra.mxu0 %v387
        %505 = vmatmul.f32.gmra.mxu0 %v394
        %v506 = vpop.f32.mrf.mxu0
        %v507 = vadd.f32 0.0, %v506
        %508 = vmatmul.f32.gmra.mxu0 %v397
        %v509 = vpop.f32.mrf.mxu0
        %v510 = vadd.f32 0.0, %v509
        %511 = vmatmul.f32.gmra.mxu0 %v400
        %v512 = vpop.f32.mrf.mxu0
        %v513 = vadd.f32 0.0, %v512
        %514 = vmatmul.f32.gmra.mxu0 %v403
        %v515 = vpop.f32.mrf.mxu0
        %v516 = vadd.f32 0.0, %v515
        %517 = vmatmul.f32.gmra.mxu0 %v406
        %v518 = vpop.f32.mrf.mxu0
        %v519 = vadd.f32 0.0, %v518
        %520 = vmatmul.f32.gmra.mxu0 %v409
        %v521 = vpop.f32.mrf.mxu0
        %v522 = vadd.f32 0.0, %v521
        %523 = vmatmul.f32.gmra.mxu0 %v412
        %v524 = vpop.f32.mrf.mxu0
        %v525 = vadd.f32 0.0, %v524
        %526 = vmatmul.f32.gmra.mxu0 %v415
        %v527 = vpop.f32.mrf.mxu0
        %v528 = vadd.f32 0.0, %v527
        %529 = vmatmul.f32.gmra.mxu0 %v418
        %v530 = vpop.f32.mrf.mxu0
        %v531 = vadd.f32 0.0, %v530
        %532 = vmatmul.f32.gmra.mxu0 %v421
        %v533 = vpop.f32.mrf.mxu0
        %v534 = vadd.f32 0.0, %v533
        %535 = vmatmul.f32.gmra.mxu0 %v424
        %v536 = vpop.f32.mrf.mxu0
        %v537 = vadd.f32 0.0, %v536
        %538 = vmatmul.f32.gmra.mxu0 %v427
        %v539 = vpop.f32.mrf.mxu0
        %v540 = vadd.f32 0.0, %v539
        %541 = vmatmul.f32.gmra.mxu0 %v430
        %v542 = vpop.f32.mrf.mxu0
        %v543 = vadd.f32 0.0, %v542
        %544 = vmatmul.f32.gmra.mxu0 %v433
        %v545 = vpop.f32.mrf.mxu0
        %v546 = vadd.f32 0.0, %v545
        %547 = vmatmul.f32.gmra.mxu0 %v436
        %v548 = vpop.f32.mrf.mxu0
        %v549 = vadd.f32 0.0, %v548
        %550 = vmatmul.f32.gmra.mxu0 %v439
        %v551 = vpop.f32.mrf.mxu0
        %v552 = vadd.f32 0.0, %v551
        %553 = vmatmul.f32.gmra.mxu0 %v442
        %v554 = vpop.f32.mrf.mxu0
        %v555 = vadd.f32 0.0, %v554
        %556 = vmatmul.f32.gmra.mxu0 %v445
        %v557 = vpop.f32.mrf.mxu0
        %v558 = vadd.f32 0.0, %v557
        %559 = vmatmul.f32.gmra.mxu0 %v448
        %v560 = vpop.f32.mrf.mxu0
        %v561 = vadd.f32 0.0, %v560
        %562 = vmatmul.f32.gmra.mxu0 %v451
        %v563 = vpop.f32.mrf.mxu0
        %v564 = vadd.f32 0.0, %v563
        %565 = vmatmul.f32.gmra.mxu0 %v454
        %v566 = vpop.f32.mrf.mxu0
        %v567 = vadd.f32 0.0, %v566
        %568 = vmatmul.f32.gmra.mxu0 %v457
        %v569 = vpop.f32.mrf.mxu0
        %v570 = vadd.f32 0.0, %v569
        %571 = vmatmul.f32.gmra.mxu0 %v460
        %v572 = vpop.f32.mrf.mxu0
        %v573 = vadd.f32 0.0, %v572
        %574 = vmatmul.f32.gmra.mxu0 %v463
        %v575 = vpop.f32.mrf.mxu0
        %v576 = vadd.f32 0.0, %v575
        %577 = vmatmul.f32.gmra.mxu0 %v466
        %v578 = vpop.f32.mrf.mxu0
        %v579 = vadd.f32 0.0, %v578
        %580 = vmatmul.f32.gmra.mxu0 %v469
        %v581 = vpop.f32.mrf.mxu0
        %v582 = vadd.f32 0.0, %v581
        %583 = vmatmul.f32.gmra.mxu0 %v472
        %v584 = vpop.f32.mrf.mxu0
        %v585 = vadd.f32 0.0, %v584
        %586 = vmatmul.f32.gmra.mxu0 %v475
        %v587 = vpop.f32.mrf.mxu0
        %v588 = vadd.f32 0.0, %v587
        %589 = vmatmul.f32.gmra.mxu0 %v478
        %v590 = vpop.f32.mrf.mxu0
        %v591 = vadd.f32 0.0, %v590
        %592 = vmatmul.f32.gmra.mxu0 %v481
        %v593 = vpop.f32.mrf.mxu0
        %v594 = vadd.f32 0.0, %v593
        %595 = vmatmul.f32.gmra.mxu0 %v484
        %v596 = vpop.f32.mrf.mxu0
        %v597 = vadd.f32 0.0, %v596
        %598 = vmatmul.f32.gmra.mxu0 %v487
        %v599 = vpop.f32.mrf.mxu0
        %v600 = vadd.f32 0.0, %v599
        %601 = vdwg.mxu0
        %v603 = vsel %vm392, %v355, 0
        %v606 = vsel %vm392, %v356, 0
        %v609 = vsel %vm392, %v357, 0
        %v612 = vsel %vm392, %v358, 0
        %v615 = vsel %vm392, %v359, 0
        %v618 = vsel %vm392, %v360, 0
        %v621 = vsel %vm392, %v361, 0
        %v624 = vsel %vm392, %v362, 0
        %v627 = vsel %vm392, %v363, 0
        %v630 = vsel %vm392, %v364, 0
        %v633 = vsel %vm392, %v365, 0
        %v636 = vsel %vm392, %v366, 0
        %v639 = vsel %vm392, %v367, 0
        %v642 = vsel %vm392, %v368, 0
        %v645 = vsel %vm392, %v369, 0
        %v648 = vsel %vm392, %v370, 0
        %v651 = vsel %vm392, %v371, 0
        %v654 = vsel %vm392, %v372, 0
        %v657 = vsel %vm392, %v373, 0
        %v660 = vsel %vm392, %v374, 0
        %v663 = vsel %vm392, %v375, 0
        %v666 = vsel %vm392, %v376, 0
        %v669 = vsel %vm392, %v377, 0
        %v672 = vsel %vm392, %v378, 0
        %v675 = vsel %vm392, %v379, 0
        %v678 = vsel %vm392, %v380, 0
        %v681 = vsel %vm392, %v381, 0
        %v684 = vsel %vm392, %v382, 0
        %v687 = vsel %vm392, %v383, 0
        %v690 = vsel %vm392, %v384, 0
        %v693 = vsel %vm392, %v385, 0
        %v696 = vsel %vm392, %v386, 0
        %698 = vmatpush.msra.mxu0 0.0
        %699 = vmatpush.msra.mxu0 0.0
        %700 = vmatpush.msra.mxu0 0.0
        %701 = vmatpush.msra.mxu0 0.0
        %702 = vmatpush.msra.mxu0 0.0
        %703 = vmatpush.msra.mxu0 0.0
        %704 = vmatpush.msra.mxu0 0.0
        %705 = vmatpush.msra.mxu0 0.0
        %706 = vmatpush.msra.mxu0 0.0
        %707 = vmatpush.msra.mxu0 0.0
        %708 = vmatpush.msra.mxu0 0.0
        %709 = vmatpush.msra.mxu0 0.0
        %710 = vmatpush.msra.mxu0 %v390
        %711 = vmatpush.msra.mxu0 %v389
        %712 = vmatpush.msra.mxu0 %v388
        %713 = vmatpush.msra.mxu0 %v387
        %714 = vmatmul.f32.gmra.mxu0 %v603
        %v715 = vpop.f32.mrf.mxu0
        %v716 = vadd.f32 0.0, %v715
        %717 = vmatmul.f32.gmra.mxu0 %v606
        %v718 = vpop.f32.mrf.mxu0
        %v719 = vadd.f32 0.0, %v718
        %720 = vmatmul.f32.gmra.mxu0 %v609
        %v721 = vpop.f32.mrf.mxu0
        %v722 = vadd.f32 0.0, %v721
        %723 = vmatmul.f32.gmra.mxu0 %v612
        %v724 = vpop.f32.mrf.mxu0
        %v725 = vadd.f32 0.0, %v724
        %726 = vmatmul.f32.gmra.mxu0 %v615
        %v727 = vpop.f32.mrf.mxu0
        %v728 = vadd.f32 0.0, %v727
        %729 = vmatmul.f32.gmra.mxu0 %v618
        %v730 = vpop.f32.mrf.mxu0
        %v731 = vadd.f32 0.0, %v730
        %732 = vmatmul.f32.gmra.mxu0 %v621
        %v733 = vpop.f32.mrf.mxu0
        %v734 = vadd.f32 0.0, %v733
        %735 = vmatmul.f32.gmra.mxu0 %v624
        %v736 = vpop.f32.mrf.mxu0
        %v737 = vadd.f32 0.0, %v736
        %738 = vmatmul.f32.gmra.mxu0 %v627
        %v739 = vpop.f32.mrf.mxu0
        %v740 = vadd.f32 0.0, %v739
        %741 = vmatmul.f32.gmra.mxu0 %v630
        %v742 = vpop.f32.mrf.mxu0
        %v743 = vadd.f32 0.0, %v742
        %744 = vmatmul.f32.gmra.mxu0 %v633
        %v745 = vpop.f32.mrf.mxu0
        %v746 = vadd.f32 0.0, %v745
        %747 = vmatmul.f32.gmra.mxu0 %v636
        %v748 = vpop.f32.mrf.mxu0
        %v749 = vadd.f32 0.0, %v748
        %750 = vmatmul.f32.gmra.mxu0 %v639
        %v751 = vpop.f32.mrf.mxu0
        %v752 = vadd.f32 0.0, %v751
        %753 = vmatmul.f32.gmra.mxu0 %v642
        %v754 = vpop.f32.mrf.mxu0
        %v755 = vadd.f32 0.0, %v754
        %756 = vmatmul.f32.gmra.mxu0 %v645
        %v757 = vpop.f32.mrf.mxu0
        %v758 = vadd.f32 0.0, %v757
        %759 = vmatmul.f32.gmra.mxu0 %v648
        %v760 = vpop.f32.mrf.mxu0
        %v761 = vadd.f32 0.0, %v760
        %762 = vmatmul.f32.gmra.mxu0 %v651
        %v763 = vpop.f32.mrf.mxu0
        %v764 = vadd.f32 0.0, %v763
        %765 = vmatmul.f32.gmra.mxu0 %v654
        %v766 = vpop.f32.mrf.mxu0
        %v767 = vadd.f32 0.0, %v766
        %768 = vmatmul.f32.gmra.mxu0 %v657
        %v769 = vpop.f32.mrf.mxu0
        %v770 = vadd.f32 0.0, %v769
        %771 = vmatmul.f32.gmra.mxu0 %v660
        %v772 = vpop.f32.mrf.mxu0
        %v773 = vadd.f32 0.0, %v772
        %774 = vmatmul.f32.gmra.mxu0 %v663
        %v775 = vpop.f32.mrf.mxu0
        %v776 = vadd.f32 0.0, %v775
        %777 = vmatmul.f32.gmra.mxu0 %v666
        %v778 = vpop.f32.mrf.mxu0
        %v779 = vadd.f32 0.0, %v778
        %780 = vmatmul.f32.gmra.mxu0 %v669
        %v781 = vpop.f32.mrf.mxu0
        %v782 = vadd.f32 0.0, %v781
        %783 = vmatmul.f32.gmra.mxu0 %v672
        %v784 = vpop.f32.mrf.mxu0
        %v785 = vadd.f32 0.0, %v784
        %786 = vmatmul.f32.gmra.mxu0 %v675
        %v787 = vpop.f32.mrf.mxu0
        %v788 = vadd.f32 0.0, %v787
        %789 = vmatmul.f32.gmra.mxu0 %v678
        %v790 = vpop.f32.mrf.mxu0
        %v791 = vadd.f32 0.0, %v790
        %792 = vmatmul.f32.gmra.mxu0 %v681
        %v793 = vpop.f32.mrf.mxu0
        %v794 = vadd.f32 0.0, %v793
        %795 = vmatmul.f32.gmra.mxu0 %v684
        %v796 = vpop.f32.mrf.mxu0
        %v797 = vadd.f32 0.0, %v796
        %798 = vmatmul.f32.gmra.mxu0 %v687
        %v799 = vpop.f32.mrf.mxu0
        %v800 = vadd.f32 0.0, %v799
        %801 = vmatmul.f32.gmra.mxu0 %v690
        %v802 = vpop.f32.mrf.mxu0
        %v803 = vadd.f32 0.0, %v802
        %804 = vmatmul.f32.gmra.mxu0 %v693
        %v805 = vpop.f32.mrf.mxu0
        %v806 = vadd.f32 0.0, %v805
        %807 = vmatmul.f32.gmra.mxu0 %v696
        %v808 = vpop.f32.mrf.mxu0
        %v809 = vadd.f32 0.0, %v808
        %810 = vdwg.mxu0
        %v811 = vrot.slane %v728, 4
        %vm812 = vcmask 1047556
        %v813 = vsel %vm812, %v811, %v716
        %v814 = vrot.slane %v716, 4
        %v815 = vsel %vm812, %v728, %v814
        %v817 = vunpack.c.l.s4 1983009808
        %v818 = vunpack.c.0.s8 %v817
        %v819 = vperm.slane %v813, %v818
        %v821 = vunpack.c.l.s4 1983009808
        %v822 = vunpack.c.0.s8 %v821
        %v823 = vperm.slane %v815, %v822
        %v824 = vrot.slane %v734, 4
        %v825 = vsel %vm812, %v824, %v722
        %v826 = vrot.slane %v722, 4
        %v827 = vsel %vm812, %v734, %v826
        %v829 = vunpack.c.l.s4 1983009808
        %v830 = vunpack.c.0.s8 %v829
        %v831 = vperm.slane %v825, %v830
        %v833 = vunpack.c.l.s4 1983009808
        %v834 = vunpack.c.0.s8 %v833
        %v835 = vperm.slane %v827, %v834
        %v836 = vrot.slane %v752, 4
        %v837 = vsel %vm812, %v836, %v740
        %v838 = vrot.slane %v740, 4
        %v839 = vsel %vm812, %v752, %v838
        %v841 = vunpack.c.l.s4 1983009808
        %v842 = vunpack.c.0.s8 %v841
        %v843 = vperm.slane %v837, %v842
        %v845 = vunpack.c.l.s4 1983009808
        %v846 = vunpack.c.0.s8 %v845
        %v847 = vperm.slane %v839, %v846
        %v848 = vrot.slane %v758, 4
        %v849 = vsel %vm812, %v848, %v746
        %v850 = vrot.slane %v746, 4
        %v851 = vsel %vm812, %v758, %v850
        %v853 = vunpack.c.l.s4 1983009808
        %v854 = vunpack.c.0.s8 %v853
        %v855 = vperm.slane %v849, %v854
        %v857 = vunpack.c.l.s4 1983009808
        %v858 = vunpack.c.0.s8 %v857
        %v859 = vperm.slane %v851, %v858
        %v860 = vrot.slane %v831, 4
        %v861 = vsel %vm812, %v860, %v819
        %v862 = vrot.slane %v819, 4
        %v863 = vsel %vm812, %v831, %v862
        %v865 = vunpack.c.l.s4 1934713408
        %v866 = vunpack.c.0.s8 %v865
        %v867 = vperm.slane %v861, %v866
        %v869 = vunpack.c.l.s4 1934713408
        %v870 = vunpack.c.0.s8 %v869
        %v871 = vperm.slane %v863, %v870
        %v872 = vrot.slane %v835, 4
        %v873 = vsel %vm812, %v872, %v823
        %v874 = vrot.slane %v823, 4
        %v875 = vsel %vm812, %v835, %v874
        %v877 = vunpack.c.l.s4 1934713408
        %v878 = vunpack.c.0.s8 %v877
        %v879 = vperm.slane %v873, %v878
        %v881 = vunpack.c.l.s4 1934713408
        %v882 = vunpack.c.0.s8 %v881
        %v883 = vperm.slane %v875, %v882
        %v884 = vrot.slane %v855, 4
        %v885 = vsel %vm812, %v884, %v843
        %v886 = vrot.slane %v843, 4
        %v887 = vsel %vm812, %v855, %v886
        %v889 = vunpack.c.l.s4 1934713408
        %v890 = vunpack.c.0.s8 %v889
        %v891 = vperm.slane %v885, %v890
        %v893 = vunpack.c.l.s4 1934713408
        %v894 = vunpack.c.0.s8 %v893
        %v895 = vperm.slane %v887, %v894
        %v896 = vrot.slane %v859, 4
        %v897 = vsel %vm812, %v896, %v847
        %v898 = vrot.slane %v847, 4
        %v899 = vsel %vm812, %v859, %v898
        %v901 = vunpack.c.l.s4 1934713408
        %v902 = vunpack.c.0.s8 %v901
        %v903 = vperm.slane %v897, %v902
        %v905 = vunpack.c.l.s4 1934713408
        %v906 = vunpack.c.0.s8 %v905
        %v907 = vperm.slane %v899, %v906
        %v908 = vrot.slane %v891, 4
        %v909 = vsel %vm812, %v908, %v867
        %v910 = vrot.slane %v867, 4
        %v911 = vsel %vm812, %v891, %v910
        %v912 = vrot.slane %v895, 4
        %v913 = vsel %vm812, %v912, %v871
        %v914 = vrot.slane %v871, 4
        %v915 = vsel %vm812, %v895, %v914
        %v916 = vrot.slane %v903, 4
        %v917 = vsel %vm812, %v916, %v879
        %v918 = vrot.slane %v879, 4
        %v919 = vsel %vm812, %v903, %v918
        %v920 = vrot.slane %v907, 4
        %v921 = vsel %vm812, %v920, %v883
        %v922 = vrot.slane %v883, 4
        %v923 = vsel %vm812, %v907, %v922
        %v924 = vrot.slane %v776, 4
        %v925 = vsel %vm812, %v924, %v764
        %v926 = vrot.slane %v764, 4
        %v927 = vsel %vm812, %v776, %v926
        %v929 = vunpack.c.l.s4 1983009808
        %v930 = vunpack.c.0.s8 %v929
        %v931 = vperm.slane %v925, %v930
        %v933 = vunpack.c.l.s4 1983009808
        %v934 = vunpack.c.0.s8 %v933
        %v935 = vperm.slane %v927, %v934
        %v936 = vrot.slane %v782, 4
        %v937 = vsel %vm812, %v936, %v770
        %v938 = vrot.slane %v770, 4
        %v939 = vsel %vm812, %v782, %v938
        %v941 = vunpack.c.l.s4 1983009808
        %v942 = vunpack.c.0.s8 %v941
        %v943 = vperm.slane %v937, %v942
        %v945 = vunpack.c.l.s4 1983009808
        %v946 = vunpack.c.0.s8 %v945
        %v947 = vperm.slane %v939, %v946
        %v948 = vrot.slane %v800, 4
        %v949 = vsel %vm812, %v948, %v788
        %v950 = vrot.slane %v788, 4
        %v951 = vsel %vm812, %v800, %v950
        %v953 = vunpack.c.l.s4 1983009808
        %v954 = vunpack.c.0.s8 %v953
        %v955 = vperm.slane %v949, %v954
        %v957 = vunpack.c.l.s4 1983009808
        %v958 = vunpack.c.0.s8 %v957
        %v959 = vperm.slane %v951, %v958
        %v960 = vrot.slane %v806, 4
        %v961 = vsel %vm812, %v960, %v794
        %v962 = vrot.slane %v794, 4
        %v963 = vsel %vm812, %v806, %v962
        %v965 = vunpack.c.l.s4 1983009808
        %v966 = vunpack.c.0.s8 %v965
        %v967 = vperm.slane %v961, %v966
        %v969 = vunpack.c.l.s4 1983009808
        %v970 = vunpack.c.0.s8 %v969
        %v971 = vperm.slane %v963, %v970
        %v972 = vrot.slane %v943, 4
        %v973 = vsel %vm812, %v972, %v931
        %v974 = vrot.slane %v931, 4
        %v975 = vsel %vm812, %v943, %v974
        %v977 = vunpack.c.l.s4 1934713408
        %v978 = vunpack.c.0.s8 %v977
        %v979 = vperm.slane %v973, %v978
        %v981 = vunpack.c.l.s4 1934713408
        %v982 = vunpack.c.0.s8 %v981
        %v983 = vperm.slane %v975, %v982
        %v984 = vrot.slane %v947, 4
        %v985 = vsel %vm812, %v984, %v935
        %v986 = vrot.slane %v935, 4
        %v987 = vsel %vm812, %v947, %v986
        %v989 = vunpack.c.l.s4 1934713408
        %v990 = vunpack.c.0.s8 %v989
        %v991 = vperm.slane %v985, %v990
        %v993 = vunpack.c.l.s4 1934713408
        %v994 = vunpack.c.0.s8 %v993
        %v995 = vperm.slane %v987, %v994
        %v996 = vrot.slane %v967, 4
        %v997 = vsel %vm812, %v996, %v955
        %v998 = vrot.slane %v955, 4
        %v999 = vsel %vm812, %v967, %v998
        %v1001 = vunpack.c.l.s4 1934713408
        %v1002 = vunpack.c.0.s8 %v1001
        %v1003 = vperm.slane %v997, %v1002
        %v1005 = vunpack.c.l.s4 1934713408
        %v1006 = vunpack.c.0.s8 %v1005
        %v1007 = vperm.slane %v999, %v1006
        %v1008 = vrot.slane %v971, 4
        %v1009 = vsel %vm812, %v1008, %v959
        %v1010 = vrot.slane %v959, 4
        %v1011 = vsel %vm812, %v971, %v1010
        %v1013 = vunpack.c.l.s4 1934713408
        %v1014 = vunpack.c.0.s8 %v1013
        %v1015 = vperm.slane %v1009, %v1014
        %v1017 = vunpack.c.l.s4 1934713408
        %v1018 = vunpack.c.0.s8 %v1017
        %v1019 = vperm.slane %v1011, %v1018
        %v1020 = vrot.slane %v1003, 4
        %v1021 = vsel %vm812, %v1020, %v979
        %v1022 = vrot.slane %v979, 4
        %v1023 = vsel %vm812, %v1003, %v1022
        %v1024 = vrot.slane %v1007, 4
        %v1025 = vsel %vm812, %v1024, %v983
        %v1026 = vrot.slane %v983, 4
        %v1027 = vsel %vm812, %v1007, %v1026
        %v1028 = vrot.slane %v1015, 4
        %v1029 = vsel %vm812, %v1028, %v991
        %v1030 = vrot.slane %v991, 4
        %v1031 = vsel %vm812, %v1015, %v1030
        %v1032 = vrot.slane %v1019, 4
        %v1033 = vsel %vm812, %v1032, %v995
        %v1034 = vrot.slane %v995, 4
        %v1035 = vsel %vm812, %v1019, %v1034
        %v1036 = vrot.slane %v731, 4
        %v1037 = vsel %vm812, %v1036, %v719
        %v1038 = vrot.slane %v719, 4
        %v1039 = vsel %vm812, %v731, %v1038
        %v1041 = vunpack.c.l.s4 1983009808
        %v1042 = vunpack.c.0.s8 %v1041
        %v1043 = vperm.slane %v1037, %v1042
        %v1045 = vunpack.c.l.s4 1983009808
        %v1046 = vunpack.c.0.s8 %v1045
        %v1047 = vperm.slane %v1039, %v1046
        %v1048 = vrot.slane %v737, 4
        %v1049 = vsel %vm812, %v1048, %v725
        %v1050 = vrot.slane %v725, 4
        %v1051 = vsel %vm812, %v737, %v1050
        %v1053 = vunpack.c.l.s4 1983009808
        %v1054 = vunpack.c.0.s8 %v1053
        %v1055 = vperm.slane %v1049, %v1054
        %v1057 = vunpack.c.l.s4 1983009808
        %v1058 = vunpack.c.0.s8 %v1057
        %v1059 = vperm.slane %v1051, %v1058
        %v1060 = vrot.slane %v755, 4
        %v1061 = vsel %vm812, %v1060, %v743
        %v1062 = vrot.slane %v743, 4
        %v1063 = vsel %vm812, %v755, %v1062
        %v1065 = vunpack.c.l.s4 1983009808
        %v1066 = vunpack.c.0.s8 %v1065
        %v1067 = vperm.slane %v1061, %v1066
        %v1069 = vunpack.c.l.s4 1983009808
        %v1070 = vunpack.c.0.s8 %v1069
        %v1071 = vperm.slane %v1063, %v1070
        %v1072 = vrot.slane %v761, 4
        %v1073 = vsel %vm812, %v1072, %v749
        %v1074 = vrot.slane %v749, 4
        %v1075 = vsel %vm812, %v761, %v1074
        %v1077 = vunpack.c.l.s4 1983009808
        %v1078 = vunpack.c.0.s8 %v1077
        %v1079 = vperm.slane %v1073, %v1078
        %v1081 = vunpack.c.l.s4 1983009808
        %v1082 = vunpack.c.0.s8 %v1081
        %v1083 = vperm.slane %v1075, %v1082
        %v1084 = vrot.slane %v1055, 4
        %v1085 = vsel %vm812, %v1084, %v1043
        %v1086 = vrot.slane %v1043, 4
        %v1087 = vsel %vm812, %v1055, %v1086
        %v1089 = vunpack.c.l.s4 1934713408
        %v1090 = vunpack.c.0.s8 %v1089
        %v1091 = vperm.slane %v1085, %v1090
        %v1093 = vunpack.c.l.s4 1934713408
        %v1094 = vunpack.c.0.s8 %v1093
        %v1095 = vperm.slane %v1087, %v1094
        %v1096 = vrot.slane %v1059, 4
        %v1097 = vsel %vm812, %v1096, %v1047
        %v1098 = vrot.slane %v1047, 4
        %v1099 = vsel %vm812, %v1059, %v1098
        %v1101 = vunpack.c.l.s4 1934713408
        %v1102 = vunpack.c.0.s8 %v1101
        %v1103 = vperm.slane %v1097, %v1102
        %v1105 = vunpack.c.l.s4 1934713408
        %v1106 = vunpack.c.0.s8 %v1105
        %v1107 = vperm.slane %v1099, %v1106
        %v1108 = vrot.slane %v1079, 4
        %v1109 = vsel %vm812, %v1108, %v1067
        %v1110 = vrot.slane %v1067, 4
        %v1111 = vsel %vm812, %v1079, %v1110
        %v1113 = vunpack.c.l.s4 1934713408
        %v1114 = vunpack.c.0.s8 %v1113
        %v1115 = vperm.slane %v1109, %v1114
        %v1117 = vunpack.c.l.s4 1934713408
        %v1118 = vunpack.c.0.s8 %v1117
        %v1119 = vperm.slane %v1111, %v1118
        %v1120 = vrot.slane %v1083, 4
        %v1121 = vsel %vm812, %v1120, %v1071
        %v1122 = vrot.slane %v1071, 4
        %v1123 = vsel %vm812, %v1083, %v1122
        %v1125 = vunpack.c.l.s4 1934713408
        %v1126 = vunpack.c.0.s8 %v1125
        %v1127 = vperm.slane %v1121, %v1126
        %v1129 = vunpack.c.l.s4 1934713408
        %v1130 = vunpack.c.0.s8 %v1129
        %v1131 = vperm.slane %v1123, %v1130
        %v1132 = vrot.slane %v1115, 4
        %v1133 = vsel %vm812, %v1132, %v1091
        %v1134 = vrot.slane %v1091, 4
        %v1135 = vsel %vm812, %v1115, %v1134
        %v1136 = vrot.slane %v1119, 4
        %v1137 = vsel %vm812, %v1136, %v1095
        %v1138 = vrot.slane %v1095, 4
        %v1139 = vsel %vm812, %v1119, %v1138
        %v1140 = vrot.slane %v1127, 4
        %v1141 = vsel %vm812, %v1140, %v1103
        %v1142 = vrot.slane %v1103, 4
        %v1143 = vsel %vm812, %v1127, %v1142
        %v1144 = vrot.slane %v1131, 4
        %v1145 = vsel %vm812, %v1144, %v1107
        %v1146 = vrot.slane %v1107, 4
        %v1147 = vsel %vm812, %v1131, %v1146
        %v1148 = vrot.slane %v779, 4
        %v1149 = vsel %vm812, %v1148, %v767
        %v1150 = vrot.slane %v767, 4
        %v1151 = vsel %vm812, %v779, %v1150
        %v1153 = vunpack.c.l.s4 1983009808
        %v1154 = vunpack.c.0.s8 %v1153
        %v1155 = vperm.slane %v1149, %v1154
        %v1157 = vunpack.c.l.s4 1983009808
        %v1158 = vunpack.c.0.s8 %v1157
        %v1159 = vperm.slane %v1151, %v1158
        %v1160 = vrot.slane %v785, 4
        %v1161 = vsel %vm812, %v1160, %v773
        %v1162 = vrot.slane %v773, 4
        %v1163 = vsel %vm812, %v785, %v1162
        %v1165 = vunpack.c.l.s4 1983009808
        %v1166 = vunpack.c.0.s8 %v1165
        %v1167 = vperm.slane %v1161, %v1166
        %v1169 = vunpack.c.l.s4 1983009808
        %v1170 = vunpack.c.0.s8 %v1169
        %v1171 = vperm.slane %v1163, %v1170
        %v1172 = vrot.slane %v803, 4
        %v1173 = vsel %vm812, %v1172, %v791
        %v1174 = vrot.slane %v791, 4
        %v1175 = vsel %vm812, %v803, %v1174
        %v1177 = vunpack.c.l.s4 1983009808
        %v1178 = vunpack.c.0.s8 %v1177
        %v1179 = vperm.slane %v1173, %v1178
        %v1181 = vunpack.c.l.s4 1983009808
        %v1182 = vunpack.c.0.s8 %v1181
        %v1183 = vperm.slane %v1175, %v1182
        %v1184 = vrot.slane %v809, 4
        %v1185 = vsel %vm812, %v1184, %v797
        %v1186 = vrot.slane %v797, 4
        %v1187 = vsel %vm812, %v809, %v1186
        %v1189 = vunpack.c.l.s4 1983009808
        %v1190 = vunpack.c.0.s8 %v1189
        %v1191 = vperm.slane %v1185, %v1190
        %v1193 = vunpack.c.l.s4 1983009808
        %v1194 = vunpack.c.0.s8 %v1193
        %v1195 = vperm.slane %v1187, %v1194
        %v1196 = vrot.slane %v1167, 4
        %v1197 = vsel %vm812, %v1196, %v1155
        %v1198 = vrot.slane %v1155, 4
        %v1199 = vsel %vm812, %v1167, %v1198
        %v1201 = vunpack.c.l.s4 1934713408
        %v1202 = vunpack.c.0.s8 %v1201
        %v1203 = vperm.slane %v1197, %v1202
        %v1205 = vunpack.c.l.s4 1934713408
        %v1206 = vunpack.c.0.s8 %v1205
        %v1207 = vperm.slane %v1199, %v1206
        %v1208 = vrot.slane %v1171, 4
        %v1209 = vsel %vm812, %v1208, %v1159
        %v1210 = vrot.slane %v1159, 4
        %v1211 = vsel %vm812, %v1171, %v1210
        %v1213 = vunpack.c.l.s4 1934713408
        %v1214 = vunpack.c.0.s8 %v1213
        %v1215 = vperm.slane %v1209, %v1214
        %v1217 = vunpack.c.l.s4 1934713408
        %v1218 = vunpack.c.0.s8 %v1217
        %v1219 = vperm.slane %v1211, %v1218
        %v1220 = vrot.slane %v1191, 4
        %v1221 = vsel %vm812, %v1220, %v1179
        %v1222 = vrot.slane %v1179, 4
        %v1223 = vsel %vm812, %v1191, %v1222
        %v1225 = vunpack.c.l.s4 1934713408
        %v1226 = vunpack.c.0.s8 %v1225
        %v1227 = vperm.slane %v1221, %v1226
        %v1229 = vunpack.c.l.s4 1934713408
        %v1230 = vunpack.c.0.s8 %v1229
        %v1231 = vperm.slane %v1223, %v1230
        %v1232 = vrot.slane %v1195, 4
        %v1233 = vsel %vm812, %v1232, %v1183
        %v1234 = vrot.slane %v1183, 4
        %v1235 = vsel %vm812, %v1195, %v1234
        %v1237 = vunpack.c.l.s4 1934713408
        %v1238 = vunpack.c.0.s8 %v1237
        %v1239 = vperm.slane %v1233, %v1238
        %v1241 = vunpack.c.l.s4 1934713408
        %v1242 = vunpack.c.0.s8 %v1241
        %v1243 = vperm.slane %v1235, %v1242
        %v1244 = vrot.slane %v1227, 4
        %v1245 = vsel %vm812, %v1244, %v1203
        %v1246 = vrot.slane %v1203, 4
        %v1247 = vsel %vm812, %v1227, %v1246
        %v1248 = vrot.slane %v1231, 4
        %v1249 = vsel %vm812, %v1248, %v1207
        %v1250 = vrot.slane %v1207, 4
        %v1251 = vsel %vm812, %v1231, %v1250
        %v1252 = vrot.slane %v1239, 4
        %v1253 = vsel %vm812, %v1252, %v1215
        %v1254 = vrot.slane %v1215, 4
        %v1255 = vsel %vm812, %v1239, %v1254
        %v1256 = vrot.slane %v1243, 4
        %v1257 = vsel %vm812, %v1256, %v1219
        %v1258 = vrot.slane %v1219, 4
        %v1259 = vsel %vm812, %v1243, %v1258
        %v1260 = vadd.f32 %v507, %v909
        %v1261 = vadd.f32 %v510, %v1021
        %v1262 = vadd.f32 %v513, %v911
        %v1263 = vadd.f32 %v516, %v1023
        %v1264 = vadd.f32 %v519, %v913
        %v1265 = vadd.f32 %v522, %v1025
        %v1266 = vadd.f32 %v525, %v915
        %v1267 = vadd.f32 %v528, %v1027
        %v1268 = vadd.f32 %v531, %v917
        %v1269 = vadd.f32 %v534, %v1029
        %v1270 = vadd.f32 %v537, %v919
        %v1271 = vadd.f32 %v540, %v1031
        %v1272 = vadd.f32 %v543, %v921
        %v1273 = vadd.f32 %v546, %v1033
        %v1274 = vadd.f32 %v549, %v923
        %v1275 = vadd.f32 %v552, %v1035
        %v1276 = vadd.f32 %v555, %v1133
        %v1277 = vadd.f32 %v558, %v1245
        %v1278 = vadd.f32 %v561, %v1135
        %v1279 = vadd.f32 %v564, %v1247
        %v1280 = vadd.f32 %v567, %v1137
        %v1281 = vadd.f32 %v570, %v1249
        %v1282 = vadd.f32 %v573, %v1139
        %v1283 = vadd.f32 %v576, %v1251
        %v1284 = vadd.f32 %v579, %v1141
        %v1285 = vadd.f32 %v582, %v1253
        %v1286 = vadd.f32 %v585, %v1143
        %v1287 = vadd.f32 %v588, %v1255
        %v1288 = vadd.f32 %v591, %v1145
        %v1289 = vadd.f32 %v594, %v1257
        %v1290 = vadd.f32 %v597, %v1147
        %v1291 = vadd.f32 %v600, %v1259
        %v1293 = vperm.slane %v391, 0
        %v1295 = vadd.f32 %v1260, %v1293
        %v1296 = vadd.f32 %v1261, %v1293
        %v1297 = vadd.f32 %v1262, %v1293
        %v1298 = vadd.f32 %v1263, %v1293
        %v1299 = vadd.f32 %v1264, %v1293
        %v1300 = vadd.f32 %v1265, %v1293
        %v1301 = vadd.f32 %v1266, %v1293
        %v1302 = vadd.f32 %v1267, %v1293
        %v1303 = vadd.f32 %v1268, %v1293
        %v1304 = vadd.f32 %v1269, %v1293
        %v1305 = vadd.f32 %v1270, %v1293
        %v1306 = vadd.f32 %v1271, %v1293
        %v1307 = vadd.f32 %v1272, %v1293
        %v1308 = vadd.f32 %v1273, %v1293
        %v1309 = vadd.f32 %v1274, %v1293
        %v1310 = vadd.f32 %v1275, %v1293
        %v1311 = vadd.f32 %v1276, %v1293
        %v1312 = vadd.f32 %v1277, %v1293
        %v1313 = vadd.f32 %v1278, %v1293
        %v1314 = vadd.f32 %v1279, %v1293
        %v1315 = vadd.f32 %v1280, %v1293
        %v1316 = vadd.f32 %v1281, %v1293
        %v1317 = vadd.f32 %v1282, %v1293
        %v1318 = vadd.f32 %v1283, %v1293
        %v1319 = vadd.f32 %v1284, %v1293
        %v1320 = vadd.f32 %v1285, %v1293
        %v1321 = vadd.f32 %v1286, %v1293
        %v1322 = vadd.f32 %v1287, %v1293
        %v1323 = vadd.f32 %v1288, %v1293
        %v1324 = vadd.f32 %v1289, %v1293
        %v1325 = vadd.f32 %v1290, %v1293
        %v1326 = vadd.f32 %v1291, %v1293
        %vm1327 = vcmask 523264
        %1328 = vst.msk [vmem:[%s316] sm:$0xff] %vm1327, %v1295
        %1329 = vst.msk [vmem:[%s316 + $0x8] sm:$0xff] %vm1327, %v1296
        %1330 = vst.msk [vmem:[%s316 + $0x10] sm:$0xff] %vm1327, %v1297
        %1331 = vst.msk [vmem:[%s316 + $0x18] sm:$0xff] %vm1327, %v1298
        %1332 = vst.msk [vmem:[%s316 + $0x20] sm:$0xff] %vm1327, %v1299
        %1333 = vst.msk [vmem:[%s316 + $0x28] sm:$0xff] %vm1327, %v1300
        %1334 = vst.msk [vmem:[%s316 + $0x30] sm:$0xff] %vm1327, %v1301
        %1335 = vst.msk [vmem:[%s316 + $0x38] sm:$0xff] %vm1327, %v1302
        %1336 = vst.msk [vmem:[%s316 + $0x40] sm:$0xff] %vm1327, %v1303
        %1337 = vst.msk [vmem:[%s316 + $0x48] sm:$0xff] %vm1327, %v1304
        %1338 = vst.msk [vmem:[%s316 + $0x50] sm:$0xff] %vm1327, %v1305
        %1339 = vst.msk [vmem:[%s316 + $0x58] sm:$0xff] %vm1327, %v1306
        %1340 = vst.msk [vmem:[%s316 + $0x60] sm:$0xff] %vm1327, %v1307
        %1341 = vst.msk [vmem:[%s316 + $0x68] sm:$0xff] %vm1327, %v1308
        %1342 = vst.msk [vmem:[%s316 + $0x70] sm:$0xff] %vm1327, %v1309
        %1343 = vst.msk [vmem:[%s316 + $0x78] sm:$0xff] %vm1327, %v1310
        %1344 = vst.msk [vmem:[%s316 + $0x80] sm:$0xff] %vm1327, %v1311
        %1345 = vst.msk [vmem:[%s316 + $0x88] sm:$0xff] %vm1327, %v1312
        %1346 = vst.msk [vmem:[%s316 + $0x90] sm:$0xff] %vm1327, %v1313
        %1347 = vst.msk [vmem:[%s316 + $0x98] sm:$0xff] %vm1327, %v1314
        %1348 = vst.msk [vmem:[%s316 + $0xa0] sm:$0xff] %vm1327, %v1315
        %1349 = vst.msk [vmem:[%s316 + $0xa8] sm:$0xff] %vm1327, %v1316
        %1350 = vst.msk [vmem:[%s316 + $0xb0] sm:$0xff] %vm1327, %v1317
        %1351 = vst.msk [vmem:[%s316 + $0xb8] sm:$0xff] %vm1327, %v1318
        %1352 = vst.msk [vmem:[%s316 + $0xc0] sm:$0xff] %vm1327, %v1319
        %1353 = vst.msk [vmem:[%s316 + $0xc8] sm:$0xff] %vm1327, %v1320
        %1354 = vst.msk [vmem:[%s316 + $0xd0] sm:$0xff] %vm1327, %v1321
        %1355 = vst.msk [vmem:[%s316 + $0xd8] sm:$0xff] %vm1327, %v1322
        %1356 = vst.msk [vmem:[%s316 + $0xe0] sm:$0xff] %vm1327, %v1323
        %1357 = vst.msk [vmem:[%s316 + $0xe8] sm:$0xff] %vm1327, %v1324
        %1358 = vst.msk [vmem:[%s316 + $0xf0] sm:$0xff] %vm1327, %v1325
        %1359 = vst.msk [vmem:[%s316 + $0xf8] sm:$0xff] %vm1327, %v1326
        %s1360 = sand.u32 %s157, 1
        %s1361 = scalar_lea.sflag [#allocation4], %s1360
        %s1362 = sand.u32 %s157, 1
        %s1363 = smul.addr %s1362, 256
        %s1364 = scalar_lea.vmem [#allocation8], %s1363
        // Predicated region
        $region49: #{tpu_custom_call.1} parent=35 // pred_check
          %p1365 = pneg %p167
        $region50: #{tpu_custom_call.1} parent=35 // pred_check_branch
          %1367 = sbr.rel (%p1365) target = $region52
        $region51: #{tpu_custom_call.1} parent=35 // pred_region
          %s1368 = smul.u32 16, %s30
          %s1369 = smul.u32 2, %s31
          %1371 = vsyncadd %s1361, 0
          %s1372 = smul.addr %s1368, 2
          %s1373 = sadd.s32 %s1369, %s1372
          %s1374 = smul.addr %s29, 32
          %s1375 = sadd.s32 %s1373, %s1374
          %s1376 = smul.addr %s1375, 8
          %s1377 = scalar_lea.hbm %s4, %s1376
          %s1378 = sshll.u32 %s1364, 4
          %s1379 = int_to_ptr.vmem [resolvable:$true] %s1378
          %s1380 = sshll.u32 %s1377, 4
          %s1381 = int_to_ptr.hbm [resolvable:$true] %s1380
          %1386 = dma.vmem_to_hbm [thread:$0]  %s1379, 4096, %s1381, %s1361, 128, 128, 8
        $region52: #{tpu_custom_call.1} parent=35 // pred_fallthru
          _
      $region36: #{tpu_custom_call.1} parent=5 // pred_fallthru
        _
      %p1387 = scmp.le.s32.totalorder 2, %s19
      // Predicated region
      $region53: #{tpu_custom_call.1} parent=5 // pred_check
        %p1388 = pneg %p1387
      $region54: #{tpu_custom_call.1} parent=5 // pred_check_branch
        %1390 = sbr.rel (%p1388) target = $region56
      $region55: #{tpu_custom_call.1} parent=5 // pred_region
        %s1391 = ssub.s32 %s19, 2
        // Predicated region
        $region57: #{tpu_custom_call.1} parent=55 // pred_check
          %p1392 = pneg %p173
        $region58: #{tpu_custom_call.1} parent=55 // pred_check_branch
          %1394 = sbr.rel (%p1392) target = $region60
        $region59: #{tpu_custom_call.1} parent=55 // pred_region
          %s1395 = sand.u32 %s158, 1
          %s1396 = scalar_lea.sflag [#allocation4], %s1395
          %s1397 = sand.u32 %s158, 1
          %s1398 = smul.addr %s1397, 256
          %s1399 = scalar_lea.vmem [#allocation8], %s1398
          %1401 = dma.done %s1396, 4096
        $region60: #{tpu_custom_call.1} parent=55 // pred_fallthru
          _
      $region56: #{tpu_custom_call.1} parent=5 // pred_fallthru
        _
    $region6: #{tpu_custom_call.1} parent=1 // loop_footer
      %s23 = sadd.s32 1, %s19
    $region7: #{tpu_custom_call.1} parent=1 // loop_footer_branch
      %18 = sbr.rel target = $region3
    $region8: #{tpu_custom_call.1} parent=1 // loop_exit
      _
    %1402 = vsyncpa [#allocation3], 1
    %s1403 = scalar_lea.sflag [#allocation3], 1
    %1404 = vsyncpa %s1403, 1
    %1405 = vsyncpa [#allocation6], 1
    %s1406 = scalar_lea.sflag [#allocation6], 1
    %1407 = vsyncpa %s1406, 1
    %1408 = vsyncpa [#allocation4], 1
    %s1409 = scalar_lea.sflag [#allocation4], 1
    %1410 = vsyncpa %s1409, 1

</llo_original>
